<compile_context>
chip_gen: v5e
topology: v5e:2x2
jax: 0.10.0
libtpu: 0.0.40
codegen_flags: <defaults>
</compile_context>

<pallas_src>
import jax
import jax.numpy as jnp
from jax import lax
from jax.experimental import pallas as pl
from jax.experimental.pallas import tpu as pltpu

EPS = 1e-5  # nn.LayerNorm default


def _round_up(a: int, b: int) -> int:
    return (a + b - 1) // b * b


def _cdiv(a: int, b: int) -> int:
    return (a + b - 1) // b


def _stem_kernel(p_ref, w_ref, pr_ref, o_ref):
    # p_ref: (TM, K) bf16   w_ref: (K, Cout) bf16   pr_ref: (3, Cout) f32 = [bias; gamma; beta]
    # Conv-as-matmul on the MXU, f32 accumulate.
    acc = jnp.dot(p_ref[...], w_ref[...], preferred_element_type=jnp.float32)
    pr = pr_ref[...]
    acc = acc + pr[0:1, :]  # conv bias

    # LayerNorm over the channel axis, per output pixel (two-pass variance, f32 throughout).
    mean = jnp.mean(acc, axis=-1, keepdims=True)
    xc = acc - mean
    var = jnp.mean(xc * xc, axis=-1, keepdims=True)
    xn = xc * lax.rsqrt(var + EPS)
    o_ref[...] = (xn * pr[1:2, :] + pr[2:3, :]).astype(o_ref.dtype)


def stem_pallas(x_nchw, conv_w, conv_b, ln_w, ln_b, *, tm=2048, matmul_dtype=jnp.bfloat16):
    """x_nchw: (N, Cin, H, W); conv_w: (Cout, Cin, 7, 7); conv_b/ln_w/ln_b: (Cout,)."""
    N, Cin, H, W = x_nchw.shape
    Cout = conv_w.shape[0]
    KH = KW = 7
    S = 4
    PAD = 3
    Ho = (H + 2 * PAD - KH) // S + 1
    Wo = (W + 2 * PAD - KW) // S + 1
    out_dtype = x_nchw.dtype

    # --- glue: NCHW -> NHWC (cast to bf16 so any materialized patch matrix is half-size),
    #     pad, im2col in (kh, kw, cin) order -----------------------------------------------
    x = jnp.transpose(x_nchw, (0, 2, 3, 1)).astype(matmul_dtype)
    xp = jnp.pad(x, ((0, 0), (PAD, PAD), (PAD, PAD), (0, 0)))
    slabs = [xp[:, kh:kh + S * Ho:S, kw:kw + S * Wo:S, :]
             for kh in range(KH) for kw in range(KW)]                     # each (N,Ho,Wo,Cin)
    patches = jnp.stack(slabs, axis=3).reshape(N * Ho * Wo, KH * KW * Cin)  # (M, K) bf16
    M, K = patches.shape

    # weight (Cout,Cin,kh,kw) -> (kh,kw,Cin,Cout) -> (K,Cout), matching the patch ordering
    w_mat = jnp.transpose(conv_w, (2, 3, 1, 0)).reshape(K, Cout).astype(matmul_dtype)
    # conv bias / LN gamma / LN beta merged into a single small f32 operand
    params = jnp.stack([conv_b, ln_w, ln_b], axis=0).astype(jnp.float32)  # (3, Cout)

    # --- M-tile selection: as large as possible, clamped by VMEM and grid-step count -------
    in_bytes = jnp.dtype(matmul_dtype).itemsize
    out_bytes = jnp.dtype(out_dtype).itemsize
    kv = _round_up(K, 128)     # Mosaic lane-pads only inside VMEM; HBM stays unpadded
    cv = _round_up(Cout, 128)

    def vmem_bytes(t):
        return (2 * t * kv * in_bytes       # double-buffered patch tiles
                + 2 * t * cv * out_bytes    # double-buffered output tiles
                + 2 * kv * cv * in_bytes    # weight (constant index_map -> fetched once)
                + 2 * 8 * cv * 4            # params
                + 3 * t * cv * 4)           # f32 accumulator + LayerNorm temporaries

    VMEM_BUDGET = 40 * 1024 * 1024   # safe under v7x's 64 MiB physical VMEM
    VMEM_LIMIT = 48 * 1024 * 1024    # explicit scoped limit (> v5e's 16 MiB default)

    tm_eff = min(tm, _round_up(M, 16))                      # bf16 sublane packing -> x16
    if M >= 8 * 256:                                        # keep >= ~8 grid steps (megacore)
        tm_eff = min(tm_eff, max(256, _round_up(_cdiv(M, 8), 16)))
    while tm_eff > 16 and vmem_bytes(tm_eff) > VMEM_BUDGET:
        tm_eff = max(16, _round_up(tm_eff // 2, 16))

    out = pl.pallas_call(
        _stem_kernel,
        out_shape=jax.ShapeDtypeStruct((M, Cout), out_dtype),
        grid_spec=pltpu.PrefetchScalarGridSpec(
            num_scalar_prefetch=0,
            grid=(_cdiv(M, tm_eff),),
            in_specs=[
                pl.BlockSpec((tm_eff, K), lambda i: (i, 0)),   # K = full dim, no HBM pad
                pl.BlockSpec((K, Cout), lambda i: (0, 0)),     # full-dim weight block
                pl.BlockSpec((3, Cout), lambda i: (0, 0)),     # bias/gamma/beta
            ],
            out_specs=pl.BlockSpec((tm_eff, Cout), lambda i: (i, 0)),  # real-Cout lanes
        ),
        compiler_params=pltpu.CompilerParams(
            dimension_semantics=("parallel",),
            vmem_limit_bytes=VMEM_LIMIT,
            # Hint XLA to fuse the transpose/pad/strided-slice im2col chain into the
            # patch-operand DMA instead of materializing it in HBM.
            allow_input_fusion=[True, False, False],
        ),
    )(patches, w_mat, params)

    out = out.reshape(N, Ho, Wo, Cout)
    return jnp.transpose(out, (0, 3, 1, 2))  # back to NCHW (module contract)


def stem_reference(x_nchw, conv_w, conv_b, ln_w, ln_b):
    """Pure-JAX reference matching PyTorch NCHW conv + LayerNorm2d."""
    y = lax.conv_general_dilated(
        x_nchw, conv_w, window_strides=(4, 4), padding=((3, 3), (3, 3)),
        dimension_numbers=("NCHW", "OIHW", "NCHW"))
    y = y + conv_b.reshape(1, -1, 1, 1)
    yt = jnp.transpose(y, (0, 2, 3, 1))  # NHWC
    mean = jnp.mean(yt, axis=-1, keepdims=True)
    var = jnp.mean((yt - mean) ** 2, axis=-1, keepdims=True)
    yn = (yt - mean) * lax.rsqrt(var + EPS) * ln_w + ln_b
    return jnp.transpose(yn, (0, 3, 1, 2))


if __name__ == "__main__":
    key = jax.random.PRNGKey(0)
    k_x, k_w, k_b, k_g, k_beta = jax.random.split(key, 5)

    N, Cin, H, W = 2, 4, 16, 16
    Cout = 32

    x = jax.random.normal(k_x, (N, Cin, H, W), dtype=jnp.float32)
    conv_w = 0.1 * jax.random.normal(k_w, (Cout, Cin, 7, 7), dtype=jnp.float32)
    conv_b = 0.05 * jax.random.normal(k_b, (Cout,), dtype=jnp.float32)
    ln_w = 1.0 + 0.02 * jax.random.normal(k_g, (Cout,), dtype=jnp.float32)
    ln_b = 0.02 * jax.random.normal(k_beta, (Cout,), dtype=jnp.float32)

    out = jax.block_until_ready(stem_pallas(x, conv_w, conv_b, ln_w, ln_b))
    ref = jax.block_until_ready(stem_reference(x, conv_w, conv_b, ln_w, ln_b))

    assert out.shape == (N, Cout, H // 4, W // 4), out.shape
    err = float(jnp.max(jnp.abs(out.astype(jnp.float32) - ref)))
    # bf16 matmul operands with f32 accumulation -> tolerance sized for bf16 rounding.
    assert err < 3e-2, err

    print("KERNEL_OK")
</pallas_src>

<mosaic_0001>
module attributes {stable_mosaic.version = 11 : i64} {
  func.func @_stem_kernel(%arg0: i32, %arg1: memref<32x196xbf16, #tpu.memory_space<vmem>>, %arg2: memref<196x32xbf16, #tpu.memory_space<vmem>>, %arg3: memref<3x32xf32, #tpu.memory_space<vmem>>, %arg4: memref<32x32xf32, #tpu.memory_space<vmem>>) attributes {dimension_semantics = [#tpu.dimension_semantics<parallel>], iteration_bounds = array<i64: 1>, scalar_prefetch = 0 : i64, scratch_operands = 0 : i64, tpu.core_type = #tpu.core_type<tc>, window_params = [{transform_indices = @transform_0, window_bounds = array<i64: 32, 196>}, {pipeline_mode = #tpu.pipeline_mode<synchronous>, transform_indices = @transform_1, window_bounds = array<i64: 196, 32>}, {pipeline_mode = #tpu.pipeline_mode<synchronous>, transform_indices = @transform_2, window_bounds = array<i64: 3, 32>}, {transform_indices = @transform_3, window_bounds = array<i64: 32, 32>}]} {
    %c0 = arith.constant 0 : index
    %c0_0 = arith.constant 0 : index
    %0 = vector.load %arg1[%c0, %c0_0] : memref<32x196xbf16, #tpu.memory_space<vmem>>, vector<32x196xbf16>
    %c0_1 = arith.constant 0 : index
    %c0_2 = arith.constant 0 : index
    %1 = vector.load %arg2[%c0_1, %c0_2] : memref<196x32xbf16, #tpu.memory_space<vmem>>, vector<196x32xbf16>
    %cst = arith.constant dense<0.000000e+00> : vector<32x32xf32>
    %2 = tpu.matmul %0, %1, %cst {dimension_numbers = #tpu.dot_dimension_numbers<[1], [0], [0], [1], [0, 0, 1, 1], [], []>} : vector<32x196xbf16>, vector<196x32xbf16>, vector<32x32xf32> -> vector<32x32xf32>
    %c0_3 = arith.constant 0 : index
    %c0_4 = arith.constant 0 : index
    %3 = vector.load %arg3[%c0_3, %c0_4] : memref<3x32xf32, #tpu.memory_space<vmem>>, vector<3x32xf32>
    %4 = vector.extract_strided_slice %3 {offsets = [0, 0], sizes = [1, 32], strides = [1, 1]} : vector<3x32xf32> to vector<1x32xf32>
    %5 = vector.broadcast %4 : vector<1x32xf32> to vector<32x32xf32>
    %6 = arith.addf %2, %5 : vector<32x32xf32>
    %cst_5 = arith.constant dense<0.000000e+00> : vector<32xf32>
    %7 = vector.multi_reduction <add>, %6, %cst_5 [1] : vector<32x32xf32> to vector<32xf32>
    %8 = vector.shape_cast %7 : vector<32xf32> to vector<32x1xf32>
    %cst_6 = arith.constant 3.200000e+01 : f32
    %9 = vector.broadcast %cst_6 : f32 to vector<32x1xf32>
    %10 = arith.divf %8, %9 : vector<32x1xf32>
    %11 = vector.broadcast %10 : vector<32x1xf32> to vector<32x32xf32>
    %12 = arith.subf %6, %11 : vector<32x32xf32>
    %13 = arith.mulf %12, %12 : vector<32x32xf32>
    %cst_7 = arith.constant dense<0.000000e+00> : vector<32xf32>
    %14 = vector.multi_reduction <add>, %13, %cst_7 [1] : vector<32x32xf32> to vector<32xf32>
    %15 = vector.shape_cast %14 : vector<32xf32> to vector<32x1xf32>
    %cst_8 = arith.constant 3.200000e+01 : f32
    %16 = vector.broadcast %cst_8 : f32 to vector<32x1xf32>
    %17 = arith.divf %15, %16 : vector<32x1xf32>
    %cst_9 = arith.constant 9.99999974E-6 : f32
    %18 = vector.broadcast %cst_9 : f32 to vector<32x1xf32>
    %19 = arith.addf %17, %18 : vector<32x1xf32>
    %20 = math.rsqrt %19 : vector<32x1xf32>
    %21 = vector.broadcast %20 : vector<32x1xf32> to vector<32x32xf32>
    %22 = arith.mulf %12, %21 : vector<32x32xf32>
    %23 = vector.extract_strided_slice %3 {offsets = [1, 0], sizes = [1, 32], strides = [1, 1]} : vector<3x32xf32> to vector<1x32xf32>
    %24 = vector.broadcast %23 : vector<1x32xf32> to vector<32x32xf32>
    %25 = arith.mulf %22, %24 : vector<32x32xf32>
    %26 = vector.extract_strided_slice %3 {offsets = [2, 0], sizes = [1, 32], strides = [1, 1]} : vector<3x32xf32> to vector<1x32xf32>
    %27 = vector.broadcast %26 : vector<1x32xf32> to vector<32x32xf32>
    %28 = arith.addf %25, %27 : vector<32x32xf32>
    %c0_10 = arith.constant 0 : index
    %c0_11 = arith.constant 0 : index
    %29 = vector.load %arg4[%c0_10, %c0_11] : memref<32x32xf32, #tpu.memory_space<vmem>>, vector<32x32xf32>
    tpu.vector_store %arg4[%c0_10, %c0_11], %28 {strides = array<i32>} : memref<32x32xf32, #tpu.memory_space<vmem>>, vector<32x32xf32>,
    return
  }
  func.func @transform_0(%arg0: i32) -> (i32, i32) {
    %c0_i32 = arith.constant 0 : i32
    %c0_i32_0 = arith.constant 0 : i32
    return %arg0, %c0_i32 : i32, i32
  }
  func.func @transform_1(%arg0: i32) -> (i32, i32) {
    %c0_i32 = arith.constant 0 : i32
    %c0_i32_0 = arith.constant 0 : i32
    %c0_i32_1 = arith.constant 0 : i32
    return %c0_i32, %c0_i32_0 : i32, i32
  }
  func.func @transform_2(%arg0: i32) -> (i32, i32) {
    %c0_i32 = arith.constant 0 : i32
    %c0_i32_0 = arith.constant 0 : i32
    %c0_i32_1 = arith.constant 0 : i32
    return %c0_i32, %c0_i32_0 : i32, i32
  }
  func.func @transform_3(%arg0: i32) -> (i32, i32) {
    %c0_i32 = arith.constant 0 : i32
    %c0_i32_0 = arith.constant 0 : i32
    return %arg0, %c0_i32 : i32, i32
  }
}

</mosaic_0001>

<llo_original>
// kernel: tpu_custom_call.1
$region0: #{tpu_custom_call.1}
  #allocation0 [shape = 'u32[]', space=smem, size = 0x4, offset = 0x4, fixed_abs, tag = 'smem constant byte address 0x4 - core index']
  #allocation1 [shape = 'u32[72,128]{1,0:T(1,128)}', space=vmem, size = 0x9000, scoped, tag = 'internal scratch']
  %s0 = inlined_call_operand.vmem [shape: bf16[32,196], index: 0, kind: input, shape index: {}]
  %s1 = inlined_call_operand.vmem [shape: bf16[196,32], index: 1, kind: input, shape index: {}]
  %s2 = inlined_call_operand.vmem [shape: f32[3,32], index: 2, kind: input, shape index: {}]
  %s3 = inlined_call_operand.hbm [shape: f32[32,32], index: 3, kind: output, shape index: {}]
  %s4 = sld [smem:[#allocation0]]
  $region22: #{tpu_custom_call.1} parent=0
    _
  %s6 = ssub.s32 1, %s4
  %s7 = scalar_select 0, %s6, %s4
  $region1: #{tpu_custom_call.1} parent=0
    #allocation2 [shape = 'u8[16384]{0}', space=vmem, size = 0x4000, scoped, tag = 'output window, operand 0, single buffered']
    #allocation3 [shape = 's32[1]{0}', space=sflag, size = 0x4, scoped, tag = 'scoped memory for tpu_custom_call.1']
    %8 = vsyncpa [#allocation3], 0
    // Predicated region
    $region2: #{tpu_custom_call.1} parent=1 // pred_check
      _
    $region3: #{tpu_custom_call.1} parent=1 // pred_check_branch
      %10 = sbr.rel (0) target = $region5
    $region4: #{tpu_custom_call.1} parent=1 // pred_region
      _
    $region5: #{tpu_custom_call.1} parent=1 // pred_fallthru
      _
    // Predicated region
    $region6: #{tpu_custom_call.1} parent=1 // pred_check
      _
    $region7: #{tpu_custom_call.1} parent=1 // pred_check_branch
      %12 = sbr.rel (0) target = $region9
    $region8: #{tpu_custom_call.1} parent=1 // pred_region
      _
    $region9: #{tpu_custom_call.1} parent=1 // pred_fallthru
      _
    // Predicated region
    $region10: #{tpu_custom_call.1} parent=1 // pred_check
      _
    $region11: #{tpu_custom_call.1} parent=1 // pred_check_branch
      %14 = sbr.rel (0) target = $region13
    $region12: #{tpu_custom_call.1} parent=1 // pred_region
      _
    $region13: #{tpu_custom_call.1} parent=1 // pred_fallthru
      _
    %v16 = vld [vmem:[%s0] sm:$0xff]
    %v17 = vld [vmem:[%s0 + $0x8] sm:$0xff]
    %v18 = vld [vmem:[%s0 + $0x10] sm:$0xff]
    %v19 = vld [vmem:[%s0 + $0x18] sm:$0xff]
    %v20 = vld [vmem:[%s1] sm:$0xf]
    %v21 = vld [vmem:[%s1 + $0x4] sm:$0xf]
    %v22 = vld [vmem:[%s1 + $0x8] sm:$0xf]
    %v23 = vld [vmem:[%s1 + $0xc] sm:$0xf]
    %v24 = vld [vmem:[%s1 + $0x10] sm:$0xf]
    %v25 = vld [vmem:[%s1 + $0x14] sm:$0xf]
    %v26 = vld [vmem:[%s1 + $0x18] sm:$0xf]
    %v27 = vld [vmem:[%s1 + $0x1c] sm:$0xf]
    %v28 = vld [vmem:[%s1 + $0x20] sm:$0xf]
    %v29 = vld [vmem:[%s1 + $0x24] sm:$0xf]
    %v30 = vld [vmem:[%s1 + $0x28] sm:$0xf]
    %v31 = vld [vmem:[%s1 + $0x2c] sm:$0xf]
    %v32 = vld [vmem:[%s1 + $0x30] sm:$0xf]
    %v33 = vld [vmem:[%s1 + $0x34] sm:$0xf]
    %v34 = vld [vmem:[%s1 + $0x38] sm:$0xf]
    %v35 = vld [vmem:[%s1 + $0x3c] sm:$0xf]
    %v36 = vld [vmem:[%s1 + $0x40] sm:$0xf]
    %v37 = vld [vmem:[%s1 + $0x44] sm:$0xf]
    %v38 = vld [vmem:[%s1 + $0x48] sm:$0xf]
    %v39 = vld [vmem:[%s1 + $0x4c] sm:$0xf]
    %v40 = vld [vmem:[%s1 + $0x50] sm:$0xf]
    %v41 = vld [vmem:[%s1 + $0x54] sm:$0xf]
    %v42 = vld [vmem:[%s1 + $0x58] sm:$0xf]
    %v43 = vld [vmem:[%s1 + $0x5c] sm:$0xf]
    %v44 = vld [vmem:[%s1 + $0x60] sm:$0x3]
    %v45 = vld [vmem:[%s2] sm:$0x7]
    %v46 = vperm.slane %v45, 0
    %v51 = vunpack.c.l.b16 %v16
    %v52 = vunpack.c.h.b16 %v16
    %v53 = vunpack.c.l.b16 %v17
    %v54 = vunpack.c.h.b16 %v17
    %v55 = vunpack.c.l.b16 %v18
    %v56 = vunpack.c.h.b16 %v18
    %v57 = vunpack.c.l.b16 %v19
    %v58 = vunpack.c.h.b16 %v19
    %v59 = vpack.c.b16 %v53, %v51
    %v60 = vpack.c.b16 %v54, %v52
    %v61 = vpack.c.b16 %v57, %v55
    %v62 = vpack.c.b16 %v58, %v56
    %v90 = vunpack.c.l.b16 %v20
    %v91 = vunpack.c.l.b16 %v21
    %v92 = vunpack.c.l.b16 %v22
    %v93 = vunpack.c.l.b16 %v23
    %v94 = vunpack.c.l.b16 %v24
    %v95 = vunpack.c.l.b16 %v25
    %v96 = vunpack.c.l.b16 %v26
    %v97 = vunpack.c.l.b16 %v27
    %v98 = vunpack.c.l.b16 %v28
    %v99 = vunpack.c.l.b16 %v29
    %v100 = vunpack.c.l.b16 %v30
    %v101 = vunpack.c.l.b16 %v31
    %v102 = vunpack.c.l.b16 %v32
    %v103 = vunpack.c.l.b16 %v33
    %v104 = vunpack.c.l.b16 %v34
    %v105 = vunpack.c.l.b16 %v35
    %v106 = vunpack.c.l.b16 %v36
    %v107 = vunpack.c.l.b16 %v37
    %v108 = vunpack.c.l.b16 %v38
    %v109 = vunpack.c.l.b16 %v39
    %v110 = vunpack.c.l.b16 %v40
    %v111 = vunpack.c.l.b16 %v41
    %v112 = vunpack.c.l.b16 %v42
    %v113 = vunpack.c.l.b16 %v43
    %v114 = vunpack.c.l.b16 %v44
    %v115 = vpack.c.b16 %v91, %v90
    %v116 = vpack.c.b16 %v93, %v92
    %v117 = vpack.c.b16 %v95, %v94
    %v118 = vpack.c.b16 %v97, %v96
    %v119 = vpack.c.b16 %v99, %v98
    %v120 = vpack.c.b16 %v101, %v100
    %v121 = vpack.c.b16 %v103, %v102
    %v122 = vpack.c.b16 %v105, %v104
    %v123 = vpack.c.b16 %v107, %v106
    %v124 = vpack.c.b16 %v109, %v108
    %v125 = vpack.c.b16 %v111, %v110
    %v126 = vpack.c.b16 %v113, %v112
    %v127 = vpack.c.b16 %v114, %v114
    %vm140 = vcmask 556032
    %v142 = vsel %vm140, %v60, 0
    %v145 = vsel %vm140, %v62, 0
    %vm147 = vcmask 1041408
    %v149 = vsel %vm147, %v127, 0
    %151 = vmatpush.bf16.msra.mxu0 %v122
    %152 = vmatpush.bf16.msra.mxu0 %v121
    %153 = vmatpush.bf16.msra.mxu0 %v120
    %154 = vmatpush.bf16.msra.mxu0 %v119
    %155 = vmatpush.bf16.msra.mxu0 %v118
    %156 = vmatpush.bf16.msra.mxu0 %v117
    %157 = vmatpush.bf16.msra.mxu0 %v116
    %158 = vmatpush.bf16.msra.mxu0 %v115
    %159 = vmatmul.bf16.gmra.mxu0 %v59
    %v160 = vpop.f32.mrf.mxu0
    %v161 = vadd.f32 %v46, %v160
    %v162 = vpop.f32.mrf.mxu0
    %v163 = vadd.f32 %v46, %v162
    %164 = vmatmul.bf16.gmra.mxu0 %v61
    %v165 = vpop.f32.mrf.mxu0
    %v166 = vadd.f32 %v46, %v165
    %v167 = vpop.f32.mrf.mxu0
    %v168 = vadd.f32 %v46, %v167
    %169 = vdwg.mxu0
    %170 = vmatpush.bf16.msra.mxu0 0
    %171 = vmatpush.bf16.msra.mxu0 0
    %172 = vmatpush.bf16.msra.mxu0 0
    %173 = vmatpush.bf16.msra.mxu0 %v149
    %174 = vmatpush.bf16.msra.mxu0 %v126
    %175 = vmatpush.bf16.msra.mxu0 %v125
    %176 = vmatpush.bf16.msra.mxu0 %v124
    %177 = vmatpush.bf16.msra.mxu0 %v123
    %178 = vmatmul.bf16.gmra.mxu0 %v142
    %v179 = vpop.f32.mrf.mxu0
    %v180 = vadd.f32 %v161, %v179
    %v181 = vpop.f32.mrf.mxu0
    %v182 = vadd.f32 %v163, %v181
    %183 = vmatmul.bf16.gmra.mxu0 %v145
    %v184 = vpop.f32.mrf.mxu0
    %v185 = vadd.f32 %v166, %v184
    %v186 = vpop.f32.mrf.mxu0
    %v187 = vadd.f32 %v168, %v186
    %188 = vdwg.mxu0
    %vm189 = vcmask 261120
    %v190 = vsel %vm189, %v180, 0.0
    %191 = vadd.xlane.f32.xlu0 %v190
    %v192 = vpop.xlane.xlu0 %191
    %v193 = vsel %vm189, %v182, 0.0
    %194 = vadd.xlane.f32.xlu0 %v193
    %v195 = vpop.xlane.xlu0 %194
    %v196 = vsel %vm189, %v185, 0.0
    %197 = vadd.xlane.f32.xlu0 %v196
    %v198 = vpop.xlane.xlu0 %197
    %v199 = vsel %vm189, %v187, 0.0
    %200 = vadd.xlane.f32.xlu0 %v199
    %v201 = vpop.xlane.xlu0 %200
    %v202 = vrcp.pop 32.0
    %v203 = vmul.f32 32.0, %v202
    %v204 = vsub.f32 1.0, %v203
    %v205 = vmul.f32 %v202, %v204
    %v206 = vadd.f32 %v202, %v205
    %vm207 = vweird.f32 %v202
    %v208 = vsel %vm207, %v202, %v206
    %v209 = vmul.f32 %v192, %v208
    %v210 = vmul.f32 %v195, %v208
    %v211 = vmul.f32 %v198, %v208
    %v212 = vmul.f32 %v201, %v208
    %v213 = vsub.f32 %v180, %v209
    %v214 = vsub.f32 %v182, %v210
    %v215 = vsub.f32 %v185, %v211
    %v216 = vsub.f32 %v187, %v212
    %v217 = vmul.f32 %v213, %v213
    %v218 = vmul.f32 %v214, %v214
    %v219 = vmul.f32 %v215, %v215
    %v220 = vmul.f32 %v216, %v216
    %v221 = vsel %vm189, %v217, 0.0
    %222 = vadd.xlane.f32.xlu0 %v221
    %v223 = vpop.xlane.xlu0 %222
    %v224 = vsel %vm189, %v218, 0.0
    %225 = vadd.xlane.f32.xlu0 %v224
    %v226 = vpop.xlane.xlu0 %225
    %v227 = vsel %vm189, %v219, 0.0
    %228 = vadd.xlane.f32.xlu0 %v227
    %v229 = vpop.xlane.xlu0 %228
    %v230 = vsel %vm189, %v220, 0.0
    %231 = vadd.xlane.f32.xlu0 %v230
    %v232 = vpop.xlane.xlu0 %231
    %v233 = vmul.f32 %v223, %v208
    %v234 = vmul.f32 %v226, %v208
    %v235 = vmul.f32 %v229, %v208
    %v236 = vmul.f32 %v232, %v208
    %v237 = vadd.f32 %v233, 1e-05
    %v238 = vadd.f32 %v234, 1e-05
    %v239 = vadd.f32 %v235, 1e-05
    %v240 = vadd.f32 %v236, 1e-05
    %v241 = vrsqrt.pop %v237
    %v242 = vmul.f32 %v241, %v237
    %v243 = vmul.f32 %v242, %v241
    %v244 = vmul.f32 0.5, %v243
    %v245 = vsub.f32 1.5, %v244
    %v246 = vmul.f32 %v241, %v245
    %vm247 = vweird.f32 %v237
    %vm248 = vweird.f32 %v241
    %vm249 = vmor %vm247, %vm248
    %v250 = vsel %vm249, %v241, %v246
    %v251 = vrsqrt.pop %v238
    %v252 = vmul.f32 %v251, %v238
    %v253 = vmul.f32 %v252, %v251
    %v254 = vmul.f32 0.5, %v253
    %v255 = vsub.f32 1.5, %v254
    %v256 = vmul.f32 %v251, %v255
    %vm257 = vweird.f32 %v238
    %vm258 = vweird.f32 %v251
    %vm259 = vmor %vm257, %vm258
    %v260 = vsel %vm259, %v251, %v256
    %v261 = vrsqrt.pop %v239
    %v262 = vmul.f32 %v261, %v239
    %v263 = vmul.f32 %v262, %v261
    %v264 = vmul.f32 0.5, %v263
    %v265 = vsub.f32 1.5, %v264
    %v266 = vmul.f32 %v261, %v265
    %vm267 = vweird.f32 %v239
    %vm268 = vweird.f32 %v261
    %vm269 = vmor %vm267, %vm268
    %v270 = vsel %vm269, %v261, %v266
    %v271 = vrsqrt.pop %v240
    %v272 = vmul.f32 %v271, %v240
    %v273 = vmul.f32 %v272, %v271
    %v274 = vmul.f32 0.5, %v273
    %v275 = vsub.f32 1.5, %v274
    %v276 = vmul.f32 %v271, %v275
    %vm277 = vweird.f32 %v240
    %vm278 = vweird.f32 %v271
    %vm279 = vmor %vm277, %vm278
    %v280 = vsel %vm279, %v271, %v276
    %v281 = vmul.f32 %v213, %v250
    %v282 = vmul.f32 %v214, %v260
    %v283 = vmul.f32 %v215, %v270
    %v284 = vmul.f32 %v216, %v280
    %v285 = vperm.slane %v45, 1
    %v286 = vmul.f32 %v281, %v285
    %v287 = vmul.f32 %v282, %v285
    %v288 = vmul.f32 %v283, %v285
    %v289 = vmul.f32 %v284, %v285
    %v290 = vperm.slane %v45, 2
    %v291 = vadd.f32 %v286, %v290
    %v292 = vadd.f32 %v287, %v290
    %v293 = vadd.f32 %v288, %v290
    %v294 = vadd.f32 %v289, %v290
    %295 = vst.msk [vmem:[#allocation2] sm:$0xff] %vm189, %v291
    %296 = vst.msk [vmem:[#allocation2 + $0x8] sm:$0xff] %vm189, %v292
    %297 = vst.msk [vmem:[#allocation2 + $0x10] sm:$0xff] %vm189, %v293
    %298 = vst.msk [vmem:[#allocation2 + $0x18] sm:$0xff] %vm189, %v294
    // Predicated region
    $region14: #{tpu_custom_call.1} parent=1 // pred_check
      _
    $region15: #{tpu_custom_call.1} parent=1 // pred_check_branch
      %300 = sbr.rel (0) target = $region17
    $region16: #{tpu_custom_call.1} parent=1 // pred_region
      %302 = vsyncadd [#allocation3], 0
      %s303 = sshll.u32 [#allocation2], 4
      %s304 = int_to_ptr.vmem [resolvable:$true] %s303
      %s305 = sshll.u32 %s3, 4
      %s306 = int_to_ptr.hbm [resolvable:$true] %s305
      %311 = dma.vmem_to_hbm [thread:$0]  %s304, 512, %s306, [#allocation3], 128, 128, 8
    $region17: #{tpu_custom_call.1} parent=1 // pred_fallthru
      _
    // Predicated region
    $region18: #{tpu_custom_call.1} parent=1 // pred_check
      _
    $region19: #{tpu_custom_call.1} parent=1 // pred_check_branch
      %313 = sbr.rel (0) target = $region21
    $region20: #{tpu_custom_call.1} parent=1 // pred_region
      %315 = dma.done [#allocation3], 512
    $region21: #{tpu_custom_call.1} parent=1 // pred_fallthru
      _
    %316 = vsyncpa [#allocation3], 1

</llo_original>
